<compile_context>
chip_gen: v7x
topology: tpu7x:2x2x1
jax: 0.10.0
libtpu: 0.0.40
codegen_flags: <defaults>
</compile_context>

<pallas_src>
import functools

import jax
import jax.numpy as jnp
import numpy as np
from jax.experimental import pallas as pl
from jax.experimental.pallas import tpu as pltpu


def _round_up(x, m):
    return (x + m - 1) // m * m


def _residual_block_kernel(x_ref, w1_ref, b1_ref, w2_ref, b2_ref, sc_ref, o_ref,
                           *, L, L_ext, K_pad, pad, pool):
    """One batch block per grid step; all intermediates register/VMEM resident.

    x_ref  : (NB, C_in, L)        input, PyTorch NCL layout, compute dtype
    w*_ref : (K_pad*C, C_out)     tap-flattened weights (im2col order, zero-padded taps)
    b*_ref : (1, C_out)           f32
    sc_ref : (NB, C_out, L)       shortcut, NCL layout, compute dtype
    o_ref  : (NB, L_out*C_out)    lane-dense output (NLC order flattened onto lanes)
    """
    NB = x_ref.shape[0]
    c_in = x_ref.shape[1]
    c_out = w1_ref.shape[1]
    L_out = L // pool
    cdt = w1_ref.dtype

    # ---- NCL -> NLC in-kernel: per-batch 2-D XLU transposes (f32 keeps the transpose on
    # the simple 32-bit path).  For large batch_block switch this to an L-tiled fori_loop.
    x_nlc = jnp.concatenate(
        [x_ref[n].astype(jnp.float32).T[None] for n in range(NB)], axis=0)      # (NB, L, C_in)

    # ---- zero 'same' padding on the length axis, built in registers: xp[j] = x[j - 2*pad].
    Lp = L_ext + K_pad
    pieces = []
    if 2 * pad > 0:
        pieces.append(jnp.zeros((NB, 2 * pad, c_in), jnp.float32))
    pieces.append(x_nlc)
    pieces.append(jnp.zeros((NB, Lp - 2 * pad - L, c_in), jnp.float32))
    xp = jnp.concatenate(pieces, axis=1)                                         # (NB, Lp, C_in)

    # ---- conv1: ONE im2col matmul on the 8-aligned extended domain ---------------------
    # h1e[r] = b1 + sum_k W1_k . x[r + k - 2*pad],  r in [0, L_ext); taps k >= K are zero.
    # TODO(synk): verify in the bundle dump that these shifted slices lower to XLU
    # rolls/selects rather than materialized VMEM copies; if not, build them with pltpu.roll.
    slab1 = jnp.concatenate([xp[:, k:k + L_ext, :] for k in range(K_pad)], axis=-1)
    slab1 = slab1.reshape(NB * L_ext, K_pad * c_in).astype(cdt)
    h1e = jnp.dot(slab1, w1_ref[...], preferred_element_type=jnp.float32) + b1_ref[...]
    h1e = h1e.reshape(NB, L_ext, c_out)

    # Rows r in [pad, pad+L) hold the true conv1 output; zeroing the rest reproduces conv2's
    # zero 'same' padding with no VMEM scratch.  Mask iota is (1, L_ext, 1) and is broadcast
    # by jnp.where (constant across NB and C_out).
    r = jax.lax.broadcasted_iota(jnp.int32, (1, L_ext, 1), 1)
    h1m = jnp.where((r >= pad) & (r < pad + L), h1e, 0.0)

    # ---- conv2: ONE im2col matmul from the register-resident h1m ------------------------
    slab2 = jnp.concatenate([h1m[:, k:k + L, :] for k in range(K_pad)], axis=-1)
    slab2 = slab2.reshape(NB * L, K_pad * c_out).astype(cdt)
    h2 = jnp.dot(slab2, w2_ref[...], preferred_element_type=jnp.float32) + b2_ref[...]

    # ---- add shortcut (transposed in-kernel), ReLU --------------------------------------
    sc_nlc = jnp.concatenate(
        [sc_ref[n].astype(jnp.float32).T[None] for n in range(NB)], axis=0)      # (NB, L, C_out)
    y = jnp.maximum(h2 + sc_nlc.reshape(NB * L, c_out), 0.0)

    # ---- MaxPool1d(pool) along the length (sublane) axis --------------------------------
    pooled = jnp.max(y.reshape(NB * L_out, pool, c_out), axis=1)                 # (NB*L_out, C_out)
    pooled = pooled.reshape(NB, L_out, c_out)

    # ---- lane-dense store: fold L_out onto the lane axis -> 256-lane unmasked vst -------
    o_ref[...] = jnp.concatenate(
        [pooled[:, l, :] for l in range(L_out)], axis=-1).astype(o_ref.dtype)


def residual_block_pallas(x_ncl, shortcut_ncl, w1, b1, w2, b2, *, pool=2,
                          batch_block=None, compute_dtype=jnp.bfloat16, tap_pad=8):
    """x_ncl: (N, C_in, L), shortcut_ncl: (N, C_out, L), w: (C_out, C_in, K), b: (C_out,).

    compute_dtype=bf16 (default) halves input DMA / MXU input bytes on v6e/v7x while keeping
    f32 accumulation; results deviate O(1e-2) relative from an f32 reference.  Pass
    compute_dtype=jnp.float32 for bit-tight numerics (elementwise math is f32 either way,
    which is what v5e's VPU needs).
    """
    N, c_in, L = x_ncl.shape
    c_out, c_in_w1, K = w1.shape
    c_out2, c_mid, K2 = w2.shape
    assert c_in_w1 == c_in and K2 == K and c_out2 == c_out
    assert c_mid == c_out, "conv2 consumes conv1's output channels"
    assert K % 2 == 1, "odd kernel size required for 'same' padding"
    assert L % pool == 0
    pad = (K - 1) // 2
    L_out = L // pool
    K_pad = max(K, tap_pad)                                   # 160 -> 256 contraction lanes
    L_ext = _round_up(max(L + 2 * pad, L + K_pad - 1), 8)     # 8-aligned extended conv1 domain

    # One grid step by default (single-TC v5e/v6e).  For v7x, pass batch_block=N//2 and try
    # dimension_semantics=(pltpu.CORE_PARALLEL,) -- only core_parallel actually shards the
    # grid across the 2 TCs -- and benchmark against the 1-step version.
    if batch_block is None:
        batch_block = N
    G = pl.cdiv(N, batch_block)
    N_pad = G * batch_block

    out_dtype = x_ncl.dtype
    x_in = x_ncl.astype(compute_dtype)                        # halves HBM->VMEM bytes when bf16
    sc_in = shortcut_ncl.astype(compute_dtype)
    if N_pad != N:
        x_in = jnp.pad(x_in, ((0, N_pad - N), (0, 0), (0, 0)))
        sc_in = jnp.pad(sc_in, ((0, N_pad - N), (0, 0), (0, 0)))

    # (C_out, C_in, K) -> (K, C_in, C_out) -> pad taps to K_pad -> (K_pad*C_in, C_out);
    # row index = k*C_in + c; rows for taps k >= K are zero (free FLOPs, full vregs).
    def _flatten_w(w):
        wt = jnp.transpose(w, (2, 1, 0))
        wt = jnp.pad(wt, ((0, K_pad - K), (0, 0), (0, 0)))
        return wt.reshape(K_pad * w.shape[1], w.shape[0]).astype(compute_dtype)

    w1_flat = _flatten_w(w1)                                  # (K_pad*C_in,  C_out)
    w2_flat = _flatten_w(w2)                                  # (K_pad*C_mid, C_out)
    b1_2d = b1.reshape(1, c_out).astype(jnp.float32)
    b2_2d = b2.reshape(1, c_out).astype(jnp.float32)

    kernel = functools.partial(_residual_block_kernel, L=L, L_ext=L_ext, K_pad=K_pad,
                               pad=pad, pool=pool)

    # NOTE: at production L / C, tile the L axis with a halo in the index_map, cap the tile so
    # it fits v7x's 64 MiB VMEM (set vmem_limit_bytes explicitly), and keep the register-
    # resident slabs (NB*L_ext*K_pad*C*4B) well under the 64-vreg file (or build them in bf16 /
    # an L-tiled fori_loop).  Weights/biases use a constant index_map; with a single grid step
    # they are DMA'd exactly once, so no pipeline_mode/Buffered tweak is needed.
    out_flat = pl.pallas_call(
        kernel,
        out_shape=jax.ShapeDtypeStruct((N_pad, L_out * c_out), out_dtype),
        grid_spec=pltpu.PrefetchScalarGridSpec(
            num_scalar_prefetch=0,
            grid=(G,),
            in_specs=[
                pl.BlockSpec((batch_block, c_in, L), lambda g: (g, 0, 0)),        # x   (NCL)
                pl.BlockSpec((K_pad * c_in, c_out), lambda g: (0, 0)),            # w1
                pl.BlockSpec((1, c_out), lambda g: (0, 0)),                       # b1
                pl.BlockSpec((K_pad * c_mid, c_out), lambda g: (0, 0)),           # w2
                pl.BlockSpec((1, c_out), lambda g: (0, 0)),                       # b2
                pl.BlockSpec((batch_block, c_out, L), lambda g: (g, 0, 0)),       # sc  (NCL)
            ],
            out_specs=pl.BlockSpec((batch_block, L_out * c_out), lambda g: (g, 0)),
        ),
        compiler_params=pltpu.CompilerParams(dimension_semantics=("arbitrary",)),
    )(x_in, w1_flat, b1_2d, w2_flat, b2_2d, sc_in)

    if N_pad != N:
        out_flat = out_flat[:N]
    # Kernel output is lane-dense NLC flattened; only the mandatory NCL-contract transpose
    # remains on the wrapper side.
    return jnp.transpose(out_flat.reshape(N, L_out, c_out), (0, 2, 1))


def residual_block_reference(x_ncl, shortcut_ncl, w1, b1, w2, b2, *, pool=2):
    """Pure-JAX reference matching the PyTorch forward pass."""
    dn = ("NCH", "OIH", "NCH")
    pad = (w1.shape[-1] - 1) // 2
    h = jax.lax.conv_general_dilated(x_ncl, w1, (1,), [(pad, pad)],
                                     dimension_numbers=dn) + b1[None, :, None]
    h = jax.lax.conv_general_dilated(h, w2, (1,), [(pad, pad)],
                                     dimension_numbers=dn) + b2[None, :, None]
    h = jnp.maximum(h + shortcut_ncl, 0.0)
    N, C, L = h.shape
    return jnp.max(h.reshape(N, C, L // pool, pool), axis=-1)


if __name__ == "__main__":
    # Module config: input_size = out_size = 32, kernel_size = 5, pool_size = 2.
    N, C, L, K, POOL = 2, 32, 16, 5, 2

    key = jax.random.PRNGKey(0)
    kx, ks, kw1, kb1, kw2, kb2 = jax.random.split(key, 6)

    x = jax.random.normal(kx, (N, C, L), dtype=jnp.float32)
    shortcut = jax.random.normal(ks, (N, C, L), dtype=jnp.float32)

    # Deterministic PyTorch-default-style init: U(-bound, bound), bound = 1/sqrt(C_in * K)
    bound = 1.0 / np.sqrt(C * K)
    w1 = jax.random.uniform(kw1, (C, C, K), jnp.float32, -bound, bound)
    b1 = jax.random.uniform(kb1, (C,), jnp.float32, -bound, bound)
    w2 = jax.random.uniform(kw2, (C, C, K), jnp.float32, -bound, bound)
    b2 = jax.random.uniform(kb2, (C,), jnp.float32, -bound, bound)

    ref = residual_block_reference(x, shortcut, w1, b1, w2, b2, pool=POOL)

    # f32 compute path: bit-tight check against the XLA reference.
    out_f32 = residual_block_pallas(x, shortcut, w1, b1, w2, b2, pool=POOL,
                                    compute_dtype=jnp.float32)
    out_f32 = jax.block_until_ready(out_f32)
    np.testing.assert_allclose(np.asarray(out_f32), np.asarray(ref), rtol=5e-5, atol=5e-5)

    # Default bf16 compute path (v6e/v7x fast path): loose tolerance (bf16 inputs/weights,
    # f32 accumulation) -- see docstring / review note on expected deviation.
    out_bf16 = residual_block_pallas(x, shortcut, w1, b1, w2, b2, pool=POOL)
    out_bf16 = jax.block_until_ready(out_bf16)
    np.testing.assert_allclose(np.asarray(out_bf16), np.asarray(ref), rtol=5e-2, atol=5e-2)

    assert out_f32.shape == (N, C, L // POOL)
    print("KERNEL_OK")
</pallas_src>

<mosaic_0001>
module attributes {stable_mosaic.version = 11 : i64} {
  func.func @_residual_block_kernel(%arg0: i32, %arg1: memref<2x32x16xf32, #tpu.memory_space<vmem>>, %arg2: memref<256x32xf32, #tpu.memory_space<vmem>>, %arg3: memref<1x32xf32, #tpu.memory_space<vmem>>, %arg4: memref<256x32xf32, #tpu.memory_space<vmem>>, %arg5: memref<1x32xf32, #tpu.memory_space<vmem>>, %arg6: memref<2x32x16xf32, #tpu.memory_space<vmem>>, %arg7: memref<2x256xf32, #tpu.memory_space<vmem>>) attributes {dimension_semantics = [#tpu.dimension_semantics<arbitrary>], iteration_bounds = array<i64: 1>, scalar_prefetch = 0 : i64, scratch_operands = 0 : i64, tpu.core_type = #tpu.core_type<tc>, window_params = [{transform_indices = @transform_0, window_bounds = array<i64: 2, 32, 16>}, {pipeline_mode = #tpu.pipeline_mode<synchronous>, transform_indices = @transform_1, window_bounds = array<i64: 256, 32>}, {pipeline_mode = #tpu.pipeline_mode<synchronous>, transform_indices = @transform_2, window_bounds = array<i64: 1, 32>}, {pipeline_mode = #tpu.pipeline_mode<synchronous>, transform_indices = @transform_3, window_bounds = array<i64: 256, 32>}, {pipeline_mode = #tpu.pipeline_mode<synchronous>, transform_indices = @transform_4, window_bounds = array<i64: 1, 32>}, {transform_indices = @transform_5, window_bounds = array<i64: 2, 32, 16>}, {transform_indices = @transform_6, window_bounds = array<i64: 2, 256>}]} {
    %c0 = arith.constant 0 : index
    %c0_0 = arith.constant 0 : index
    %c0_1 = arith.constant 0 : index
    %0 = vector.load %arg1[%c0, %c0_0, %c0_1] : memref<2x32x16xf32, #tpu.memory_space<vmem>>, vector<1x32x16xf32>
    %1 = vector.shape_cast %0 : vector<1x32x16xf32> to vector<32x16xf32>
    %2 = tpu.transpose %1, [1, 0] : vector<32x16xf32> -> vector<16x32xf32>
    %3 = vector.shape_cast %2 : vector<16x32xf32> to vector<1x16x32xf32>
    %c1 = arith.constant 1 : index
    %c0_2 = arith.constant 0 : index
    %c0_3 = arith.constant 0 : index
    %4 = vector.load %arg1[%c1, %c0_2, %c0_3] : memref<2x32x16xf32, #tpu.memory_space<vmem>>, vector<1x32x16xf32>
    %5 = vector.shape_cast %4 : vector<1x32x16xf32> to vector<32x16xf32>
    %6 = tpu.transpose %5, [1, 0] : vector<32x16xf32> -> vector<16x32xf32>
    %7 = vector.shape_cast %6 : vector<16x32xf32> to vector<1x16x32xf32>
    %8 = tpu.concatenate %3, %7 in 0 : vector<1x16x32xf32>, vector<1x16x32xf32> -> vector<2x16x32xf32>
    %cst = arith.constant 0.000000e+00 : f32
    %9 = vector.broadcast %cst : f32 to vector<2x4x32xf32>
    %cst_4 = arith.constant 0.000000e+00 : f32
    %10 = vector.broadcast %cst_4 : f32 to vector<2x12x32xf32>
    %11 = tpu.concatenate %9, %8, %10 in 1 : vector<2x4x32xf32>, vector<2x16x32xf32>, vector<2x12x32xf32> -> vector<2x32x32xf32>
    %12 = vector.extract_strided_slice %11 {offsets = [0, 0, 0], sizes = [2, 24, 32], strides = [1, 1, 1]} : vector<2x32x32xf32> to vector<2x24x32xf32>
    %13 = vector.extract_strided_slice %11 {offsets = [0, 1, 0], sizes = [2, 24, 32], strides = [1, 1, 1]} : vector<2x32x32xf32> to vector<2x24x32xf32>
    %14 = vector.extract_strided_slice %11 {offsets = [0, 2, 0], sizes = [2, 24, 32], strides = [1, 1, 1]} : vector<2x32x32xf32> to vector<2x24x32xf32>
    %15 = vector.extract_strided_slice %11 {offsets = [0, 3, 0], sizes = [2, 24, 32], strides = [1, 1, 1]} : vector<2x32x32xf32> to vector<2x24x32xf32>
    %16 = vector.extract_strided_slice %11 {offsets = [0, 4, 0], sizes = [2, 24, 32], strides = [1, 1, 1]} : vector<2x32x32xf32> to vector<2x24x32xf32>
    %17 = vector.extract_strided_slice %11 {offsets = [0, 5, 0], sizes = [2, 24, 32], strides = [1, 1, 1]} : vector<2x32x32xf32> to vector<2x24x32xf32>
    %18 = vector.extract_strided_slice %11 {offsets = [0, 6, 0], sizes = [2, 24, 32], strides = [1, 1, 1]} : vector<2x32x32xf32> to vector<2x24x32xf32>
    %19 = vector.extract_strided_slice %11 {offsets = [0, 7, 0], sizes = [2, 24, 32], strides = [1, 1, 1]} : vector<2x32x32xf32> to vector<2x24x32xf32>
    %20 = tpu.concatenate %12, %13, %14, %15, %16, %17, %18, %19 in 2 : vector<2x24x32xf32>, vector<2x24x32xf32>, vector<2x24x32xf32>, vector<2x24x32xf32>, vector<2x24x32xf32>, vector<2x24x32xf32>, vector<2x24x32xf32>, vector<2x24x32xf32> -> vector<2x24x256xf32>
    %21 = vector.shape_cast %20 : vector<2x24x256xf32> to vector<48x256xf32>
    %c0_5 = arith.constant 0 : index
    %c0_6 = arith.constant 0 : index
    %22 = vector.load %arg2[%c0_5, %c0_6] : memref<256x32xf32, #tpu.memory_space<vmem>>, vector<256x32xf32>
    %cst_7 = arith.constant dense<0.000000e+00> : vector<48x32xf32>
    %23 = tpu.matmul %21, %22, %cst_7 {dimension_numbers = #tpu.dot_dimension_numbers<[1], [0], [0], [1], [0, 0, 1, 1], [], []>} : vector<48x256xf32>, vector<256x32xf32>, vector<48x32xf32> -> vector<48x32xf32>
    %c0_8 = arith.constant 0 : index
    %c0_9 = arith.constant 0 : index
    %24 = vector.load %arg3[%c0_8, %c0_9] : memref<1x32xf32, #tpu.memory_space<vmem>>, vector<1x32xf32>
    %25 = vector.broadcast %24 : vector<1x32xf32> to vector<48x32xf32>
    %26 = arith.addf %23, %25 : vector<48x32xf32>
    %27 = vector.shape_cast %26 : vector<48x32xf32> to vector<2x24x32xf32>
    %28 = tpu.iota {dimensions = array<i32: 1>} : vector<1x24x1xi32>
    %c2_i32 = arith.constant 2 : i32
    %29 = vector.broadcast %c2_i32 : i32 to vector<1x24x1xi32>
    %30 = arith.cmpi sge, %28, %29 : vector<1x24x1xi32>
    %c18_i32 = arith.constant 18 : i32
    %31 = vector.broadcast %c18_i32 : i32 to vector<1x24x1xi32>
    %32 = arith.cmpi slt, %28, %31 : vector<1x24x1xi32>
    %33 = arith.andi %30, %32 : vector<1x24x1xi1>
    %cst_10 = arith.constant 0.000000e+00 : f32
    %34 = vector.shape_cast %33 : vector<1x24x1xi1> to vector<1x24x1xi1>
    %35 = vector.broadcast %34 : vector<1x24x1xi1> to vector<2x24x32xi1>
    %36 = vector.broadcast %cst_10 : f32 to vector<2x24x32xf32>
    %37 = arith.select %35, %27, %36 : vector<2x24x32xi1>, vector<2x24x32xf32>
    %38 = vector.extract_strided_slice %37 {offsets = [0, 0, 0], sizes = [2, 16, 32], strides = [1, 1, 1]} : vector<2x24x32xf32> to vector<2x16x32xf32>
    %39 = vector.extract_strided_slice %37 {offsets = [0, 1, 0], sizes = [2, 16, 32], strides = [1, 1, 1]} : vector<2x24x32xf32> to vector<2x16x32xf32>
    %40 = vector.extract_strided_slice %37 {offsets = [0, 2, 0], sizes = [2, 16, 32], strides = [1, 1, 1]} : vector<2x24x32xf32> to vector<2x16x32xf32>
    %41 = vector.extract_strided_slice %37 {offsets = [0, 3, 0], sizes = [2, 16, 32], strides = [1, 1, 1]} : vector<2x24x32xf32> to vector<2x16x32xf32>
    %42 = vector.extract_strided_slice %37 {offsets = [0, 4, 0], sizes = [2, 16, 32], strides = [1, 1, 1]} : vector<2x24x32xf32> to vector<2x16x32xf32>
    %43 = vector.extract_strided_slice %37 {offsets = [0, 5, 0], sizes = [2, 16, 32], strides = [1, 1, 1]} : vector<2x24x32xf32> to vector<2x16x32xf32>
    %44 = vector.extract_strided_slice %37 {offsets = [0, 6, 0], sizes = [2, 16, 32], strides = [1, 1, 1]} : vector<2x24x32xf32> to vector<2x16x32xf32>
    %45 = vector.extract_strided_slice %37 {offsets = [0, 7, 0], sizes = [2, 16, 32], strides = [1, 1, 1]} : vector<2x24x32xf32> to vector<2x16x32xf32>
    %46 = tpu.concatenate %38, %39, %40, %41, %42, %43, %44, %45 in 2 : vector<2x16x32xf32>, vector<2x16x32xf32>, vector<2x16x32xf32>, vector<2x16x32xf32>, vector<2x16x32xf32>, vector<2x16x32xf32>, vector<2x16x32xf32>, vector<2x16x32xf32> -> vector<2x16x256xf32>
    %47 = vector.shape_cast %46 : vector<2x16x256xf32> to vector<32x256xf32>
    %c0_11 = arith.constant 0 : index
    %c0_12 = arith.constant 0 : index
    %48 = vector.load %arg4[%c0_11, %c0_12] : memref<256x32xf32, #tpu.memory_space<vmem>>, vector<256x32xf32>
    %cst_13 = arith.constant dense<0.000000e+00> : vector<32x32xf32>
    %49 = tpu.matmul %47, %48, %cst_13 {dimension_numbers = #tpu.dot_dimension_numbers<[1], [0], [0], [1], [0, 0, 1, 1], [], []>} : vector<32x256xf32>, vector<256x32xf32>, vector<32x32xf32> -> vector<32x32xf32>
    %c0_14 = arith.constant 0 : index
    %c0_15 = arith.constant 0 : index
    %50 = vector.load %arg5[%c0_14, %c0_15] : memref<1x32xf32, #tpu.memory_space<vmem>>, vector<1x32xf32>
    %51 = vector.broadcast %50 : vector<1x32xf32> to vector<32x32xf32>
    %52 = arith.addf %49, %51 : vector<32x32xf32>
    %c0_16 = arith.constant 0 : index
    %c0_17 = arith.constant 0 : index
    %c0_18 = arith.constant 0 : index
    %53 = vector.load %arg6[%c0_16, %c0_17, %c0_18] : memref<2x32x16xf32, #tpu.memory_space<vmem>>, vector<1x32x16xf32>
    %54 = vector.shape_cast %53 : vector<1x32x16xf32> to vector<32x16xf32>
    %55 = tpu.transpose %54, [1, 0] : vector<32x16xf32> -> vector<16x32xf32>
    %56 = vector.shape_cast %55 : vector<16x32xf32> to vector<1x16x32xf32>
    %c1_19 = arith.constant 1 : index
    %c0_20 = arith.constant 0 : index
    %c0_21 = arith.constant 0 : index
    %57 = vector.load %arg6[%c1_19, %c0_20, %c0_21] : memref<2x32x16xf32, #tpu.memory_space<vmem>>, vector<1x32x16xf32>
    %58 = vector.shape_cast %57 : vector<1x32x16xf32> to vector<32x16xf32>
    %59 = tpu.transpose %58, [1, 0] : vector<32x16xf32> -> vector<16x32xf32>
    %60 = vector.shape_cast %59 : vector<16x32xf32> to vector<1x16x32xf32>
    %61 = tpu.concatenate %56, %60 in 0 : vector<1x16x32xf32>, vector<1x16x32xf32> -> vector<2x16x32xf32>
    %62 = vector.shape_cast %61 : vector<2x16x32xf32> to vector<32x32xf32>
    %63 = arith.addf %52, %62 : vector<32x32xf32>
    %cst_22 = arith.constant 0.000000e+00 : f32
    %64 = vector.broadcast %cst_22 : f32 to vector<32x32xf32>
    %65 = arith.maximumf %63, %64 : vector<32x32xf32>
    %66 = vector.shape_cast %65 : vector<32x32xf32> to vector<16x2x32xf32>
    %cst_23 = arith.constant dense<0xFF800000> : vector<16x32xf32>
    %67 = vector.multi_reduction <maximumf>, %66, %cst_23 [1] : vector<16x2x32xf32> to vector<16x32xf32>
    %68 = vector.shape_cast %67 : vector<16x32xf32> to vector<2x8x32xf32>
    %69 = vector.extract_strided_slice %68 {offsets = [0, 0, 0], sizes = [2, 1, 32], strides = [1, 1, 1]} : vector<2x8x32xf32> to vector<2x1x32xf32>
    %70 = vector.shape_cast %69 : vector<2x1x32xf32> to vector<2x32xf32>
    %71 = vector.extract_strided_slice %68 {offsets = [0, 1, 0], sizes = [2, 1, 32], strides = [1, 1, 1]} : vector<2x8x32xf32> to vector<2x1x32xf32>
    %72 = vector.shape_cast %71 : vector<2x1x32xf32> to vector<2x32xf32>
    %73 = vector.extract_strided_slice %68 {offsets = [0, 2, 0], sizes = [2, 1, 32], strides = [1, 1, 1]} : vector<2x8x32xf32> to vector<2x1x32xf32>
    %74 = vector.shape_cast %73 : vector<2x1x32xf32> to vector<2x32xf32>
    %75 = vector.extract_strided_slice %68 {offsets = [0, 3, 0], sizes = [2, 1, 32], strides = [1, 1, 1]} : vector<2x8x32xf32> to vector<2x1x32xf32>
    %76 = vector.shape_cast %75 : vector<2x1x32xf32> to vector<2x32xf32>
    %77 = vector.extract_strided_slice %68 {offsets = [0, 4, 0], sizes = [2, 1, 32], strides = [1, 1, 1]} : vector<2x8x32xf32> to vector<2x1x32xf32>
    %78 = vector.shape_cast %77 : vector<2x1x32xf32> to vector<2x32xf32>
    %79 = vector.extract_strided_slice %68 {offsets = [0, 5, 0], sizes = [2, 1, 32], strides = [1, 1, 1]} : vector<2x8x32xf32> to vector<2x1x32xf32>
    %80 = vector.shape_cast %79 : vector<2x1x32xf32> to vector<2x32xf32>
    %81 = vector.extract_strided_slice %68 {offsets = [0, 6, 0], sizes = [2, 1, 32], strides = [1, 1, 1]} : vector<2x8x32xf32> to vector<2x1x32xf32>
    %82 = vector.shape_cast %81 : vector<2x1x32xf32> to vector<2x32xf32>
    %83 = vector.extract_strided_slice %68 {offsets = [0, 7, 0], sizes = [2, 1, 32], strides = [1, 1, 1]} : vector<2x8x32xf32> to vector<2x1x32xf32>
    %84 = vector.shape_cast %83 : vector<2x1x32xf32> to vector<2x32xf32>
    %85 = tpu.concatenate %70, %72, %74, %76, %78, %80, %82, %84 in 1 : vector<2x32xf32>, vector<2x32xf32>, vector<2x32xf32>, vector<2x32xf32>, vector<2x32xf32>, vector<2x32xf32>, vector<2x32xf32>, vector<2x32xf32> -> vector<2x256xf32>
    %c0_24 = arith.constant 0 : index
    %c0_25 = arith.constant 0 : index
    %86 = vector.load %arg7[%c0_24, %c0_25] : memref<2x256xf32, #tpu.memory_space<vmem>>, vector<2x256xf32>
    tpu.vector_store %arg7[%c0_24, %c0_25], %85 {strides = array<i32>} : memref<2x256xf32, #tpu.memory_space<vmem>>, vector<2x256xf32>,
    return
  }
  func.func @transform_0(%arg0: i32) -> (i32, i32, i32) {
    %c0_i32 = arith.constant 0 : i32
    %c0_i32_0 = arith.constant 0 : i32
    %c0_i32_1 = arith.constant 0 : i32
    return %arg0, %c0_i32, %c0_i32_0 : i32, i32, i32
  }
  func.func @transform_1(%arg0: i32) -> (i32, i32) {
    %c0_i32 = arith.constant 0 : i32
    %c0_i32_0 = arith.constant 0 : i32
    %c0_i32_1 = arith.constant 0 : i32
    return %c0_i32, %c0_i32_0 : i32, i32
  }
  func.func @transform_2(%arg0: i32) -> (i32, i32) {
    %c0_i32 = arith.constant 0 : i32
    %c0_i32_0 = arith.constant 0 : i32
    %c0_i32_1 = arith.constant 0 : i32
    return %c0_i32, %c0_i32_0 : i32, i32
  }
  func.func @transform_3(%arg0: i32) -> (i32, i32) {
    %c0_i32 = arith.constant 0 : i32
    %c0_i32_0 = arith.constant 0 : i32
    %c0_i32_1 = arith.constant 0 : i32
    return %c0_i32, %c0_i32_0 : i32, i32
  }
  func.func @transform_4(%arg0: i32) -> (i32, i32) {
    %c0_i32 = arith.constant 0 : i32
    %c0_i32_0 = arith.constant 0 : i32
    %c0_i32_1 = arith.constant 0 : i32
    return %c0_i32, %c0_i32_0 : i32, i32
  }
  func.func @transform_5(%arg0: i32) -> (i32, i32, i32) {
    %c0_i32 = arith.constant 0 : i32
    %c0_i32_0 = arith.constant 0 : i32
    %c0_i32_1 = arith.constant 0 : i32
    return %arg0, %c0_i32, %c0_i32_0 : i32, i32, i32
  }
  func.func @transform_6(%arg0: i32) -> (i32, i32) {
    %c0_i32 = arith.constant 0 : i32
    %c0_i32_0 = arith.constant 0 : i32
    return %arg0, %c0_i32 : i32, i32
  }
}

</mosaic_0001>

<llo_original>
// kernel: tpu_custom_call.1
$region0: #{tpu_custom_call.1}
  #allocation0 [shape = 'u32[]', space=smem, size = 0x4, offset = 0x4, fixed_abs, tag = 'smem constant byte address 0x4 - core index']
  #allocation1 [shape = 'u32[144,128]{1,0:T(1,128)}', space=vmem, size = 0x12000, scoped, tag = 'internal scratch']
  %s0 = inlined_call_operand.vmem [shape: f32[2,32,16], index: 0, kind: input, shape index: {}]
  %s1 = inlined_call_operand.vmem [shape: f32[256,32], index: 1, kind: input, shape index: {}]
  %s2 = inlined_call_operand.vmem [shape: f32[1,32], index: 2, kind: input, shape index: {}]
  %s3 = inlined_call_operand.vmem [shape: f32[256,32], index: 3, kind: input, shape index: {}]
  %s4 = inlined_call_operand.vmem [shape: f32[1,32], index: 4, kind: input, shape index: {}]
  %s5 = inlined_call_operand.vmem [shape: f32[2,32,16], index: 5, kind: input, shape index: {}]
  %s6 = inlined_call_operand.hbm [shape: f32[2,256], index: 6, kind: output, shape index: {}]
  %s7 = sld [smem:[#allocation0]]
  $region34: #{tpu_custom_call.1} parent=0
    _
  %s9 = ssub.s32 1, %s7
  %s10 = scalar_select 0, %s9, %s7
  $region1: #{tpu_custom_call.1} parent=0
    #allocation2 [shape = 'u8[2048]{0}', space=vmem, size = 0x800, scoped, tag = 'output window, operand 0, single buffered']
    #allocation3 [shape = 's32[1]{0}', space=sflag, size = 0x4, scoped, tag = 'scoped memory for tpu_custom_call.1']
    %11 = vsyncpa [#allocation3], 0
    // Predicated region
    $region2: #{tpu_custom_call.1} parent=1 // pred_check
      _
    $region3: #{tpu_custom_call.1} parent=1 // pred_check_branch
      %13 = sbr.rel (0) target = $region5
    $region4: #{tpu_custom_call.1} parent=1 // pred_region
      _
    $region5: #{tpu_custom_call.1} parent=1 // pred_fallthru
      _
    // Predicated region
    $region6: #{tpu_custom_call.1} parent=1 // pred_check
      _
    $region7: #{tpu_custom_call.1} parent=1 // pred_check_branch
      %15 = sbr.rel (0) target = $region9
    $region8: #{tpu_custom_call.1} parent=1 // pred_region
      _
    $region9: #{tpu_custom_call.1} parent=1 // pred_fallthru
      _
    // Predicated region
    $region10: #{tpu_custom_call.1} parent=1 // pred_check
      _
    $region11: #{tpu_custom_call.1} parent=1 // pred_check_branch
      %17 = sbr.rel (0) target = $region13
    $region12: #{tpu_custom_call.1} parent=1 // pred_region
      _
    $region13: #{tpu_custom_call.1} parent=1 // pred_fallthru
      _
    // Predicated region
    $region14: #{tpu_custom_call.1} parent=1 // pred_check
      _
    $region15: #{tpu_custom_call.1} parent=1 // pred_check_branch
      %19 = sbr.rel (0) target = $region17
    $region16: #{tpu_custom_call.1} parent=1 // pred_region
      _
    $region17: #{tpu_custom_call.1} parent=1 // pred_fallthru
      _
    // Predicated region
    $region18: #{tpu_custom_call.1} parent=1 // pred_check
      _
    $region19: #{tpu_custom_call.1} parent=1 // pred_check_branch
      %21 = sbr.rel (0) target = $region21
    $region20: #{tpu_custom_call.1} parent=1 // pred_region
      _
    $region21: #{tpu_custom_call.1} parent=1 // pred_fallthru
      _
    // Predicated region
    $region22: #{tpu_custom_call.1} parent=1 // pred_check
      _
    $region23: #{tpu_custom_call.1} parent=1 // pred_check_branch
      %23 = sbr.rel (0) target = $region25
    $region24: #{tpu_custom_call.1} parent=1 // pred_region
      _
    $region25: #{tpu_custom_call.1} parent=1 // pred_fallthru
      _
    %v24 = vld [vmem:[%s0] sm:$0xff]
    %v25 = vld [vmem:[%s0 + $0x8] sm:$0xff]
    %v26 = vld [vmem:[%s0 + $0x10] sm:$0xff]
    %v27 = vld [vmem:[%s0 + $0x18] sm:$0xff]
    %28 = vxpose.xlu0.b32.start [1/16] %v24, 128
    %29 = vxpose.xlu0.b32.cont [2/16] %v25, 128
    %30 = vxpose.xlu0.b32.cont [3/16] %v26, 128
    %31 = vxpose.xlu0.b32.cont [4/16] %v27, 128
    %32 = vxpose.xlu0.b32.cont [5/16] 0.0, 128
    %33 = vxpose.xlu0.b32.cont [6/16] 0.0, 128
    %34 = vxpose.xlu0.b32.cont [7/16] 0.0, 128
    %35 = vxpose.xlu0.b32.cont [8/16] 0.0, 128
    %36 = vxpose.xlu0.b32.cont [9/16] 0.0, 128
    %37 = vxpose.xlu0.b32.cont [10/16] 0.0, 128
    %38 = vxpose.xlu0.b32.cont [11/16] 0.0, 128
    %39 = vxpose.xlu0.b32.cont [12/16] 0.0, 128
    %40 = vxpose.xlu0.b32.cont [13/16] 0.0, 128
    %41 = vxpose.xlu0.b32.cont [14/16] 0.0, 128
    %42 = vxpose.xlu0.b32.cont [15/16] 0.0, 128
    %43 = vxpose.xlu0.b32.end [16/16] 0.0, 128
    %v44 = vpop.trf.xlu0
    %v45 = vpop.trf.xlu0
    %v46 = vpop.trf.xlu0
    %v47 = vpop.trf.xlu0
    %v48 = vpop.trf.xlu0
    %v49 = vpop.trf.xlu0
    %v50 = vpop.trf.xlu0
    %v51 = vpop.trf.xlu0
    %v52 = vpop.trf.xlu0
    %v53 = vpop.trf.xlu0
    %v54 = vpop.trf.xlu0
    %v55 = vpop.trf.xlu0
    %v56 = vpop.trf.xlu0
    %v57 = vpop.trf.xlu0
    %v58 = vpop.trf.xlu0
    %v59 = vpop.trf.xlu0
    %s60 = scalar_lea.vmem %s0, 32
    %v61 = vld [vmem:[%s60] sm:$0xff]
    %v62 = vld [vmem:[%s60 + $0x8] sm:$0xff]
    %v63 = vld [vmem:[%s60 + $0x10] sm:$0xff]
    %v64 = vld [vmem:[%s60 + $0x18] sm:$0xff]
    %65 = vxpose.xlu0.b32.start [1/16] %v61, 128
    %66 = vxpose.xlu0.b32.cont [2/16] %v62, 128
    %67 = vxpose.xlu0.b32.cont [3/16] %v63, 128
    %68 = vxpose.xlu0.b32.cont [4/16] %v64, 128
    %69 = vxpose.xlu0.b32.cont [5/16] 0.0, 128
    %70 = vxpose.xlu0.b32.cont [6/16] 0.0, 128
    %71 = vxpose.xlu0.b32.cont [7/16] 0.0, 128
    %72 = vxpose.xlu0.b32.cont [8/16] 0.0, 128
    %73 = vxpose.xlu0.b32.cont [9/16] 0.0, 128
    %74 = vxpose.xlu0.b32.cont [10/16] 0.0, 128
    %75 = vxpose.xlu0.b32.cont [11/16] 0.0, 128
    %76 = vxpose.xlu0.b32.cont [12/16] 0.0, 128
    %77 = vxpose.xlu0.b32.cont [13/16] 0.0, 128
    %78 = vxpose.xlu0.b32.cont [14/16] 0.0, 128
    %79 = vxpose.xlu0.b32.cont [15/16] 0.0, 128
    %80 = vxpose.xlu0.b32.end [16/16] 0.0, 128
    %v81 = vpop.trf.xlu0
    %v82 = vpop.trf.xlu0
    %v83 = vpop.trf.xlu0
    %v84 = vpop.trf.xlu0
    %v85 = vpop.trf.xlu0
    %v86 = vpop.trf.xlu0
    %v87 = vpop.trf.xlu0
    %v88 = vpop.trf.xlu0
    %v89 = vpop.trf.xlu0
    %v90 = vpop.trf.xlu0
    %v91 = vpop.trf.xlu0
    %v92 = vpop.trf.xlu0
    %v93 = vpop.trf.xlu0
    %v94 = vpop.trf.xlu0
    %v95 = vpop.trf.xlu0
    %v96 = vpop.trf.xlu0
    %vm101 = vcmask 1043456
    %v102 = vrot.slane %v44, 4
    %v103 = vrot.slane %v45, 4
    %v104 = vsel %vm101, %v102, %v103
    %v105 = vrot.slane %v81, 4
    %v106 = vrot.slane %v82, 4
    %v107 = vsel %vm101, %v105, %v106
    %v114 = vsel %vm101, 0.0, %v102
    %v115 = vsel %vm101, 0.0, %v105
    %v116 = vsel %vm101, %v103, 0.0
    %v117 = vsel %vm101, %v106, 0.0
    %vm123 = vcmask 1046528
    %v124 = vrot.slane %v114, 1
    %v125 = vrot.slane %v104, 1
    %v126 = vsel %vm123, %v124, %v125
    %v127 = vrot.slane %v116, 1
    %v128 = vsel %vm123, %v125, %v127
    %v129 = vrot.slane 0.0, 1
    %v130 = vsel %vm123, %v127, %v129
    %v131 = vrot.slane %v115, 1
    %v132 = vrot.slane %v107, 1
    %v133 = vsel %vm123, %v131, %v132
    %v134 = vrot.slane %v117, 1
    %v135 = vsel %vm123, %v132, %v134
    %v136 = vsel %vm123, %v134, %v129
    %137 = vrot.lane.b32.xlu0 %v126, 32
    %v138 = vpop.permute.xlu0 %137
    %139 = vrot.lane.b32.xlu0 %v128, 32
    %v140 = vpop.permute.xlu0 %139
    %141 = vrot.lane.b32.xlu0 %v130, 32
    %v142 = vpop.permute.xlu0 %141
    %143 = vrot.lane.b32.xlu0 %v133, 32
    %v144 = vpop.permute.xlu0 %143
    %145 = vrot.lane.b32.xlu0 %v135, 32
    %v146 = vpop.permute.xlu0 %145
    %147 = vrot.lane.b32.xlu0 %v136, 32
    %v148 = vpop.permute.xlu0 %147
    %vm155 = vcmask 1045504
    %v156 = vrot.slane %v114, 2
    %v157 = vrot.slane %v104, 2
    %v158 = vsel %vm155, %v156, %v157
    %v159 = vrot.slane %v116, 2
    %v160 = vsel %vm155, %v157, %v159
    %v161 = vrot.slane 0.0, 2
    %v162 = vsel %vm155, %v159, %v161
    %v163 = vrot.slane %v115, 2
    %v164 = vrot.slane %v107, 2
    %v165 = vsel %vm155, %v163, %v164
    %v166 = vrot.slane %v117, 2
    %v167 = vsel %vm155, %v164, %v166
    %v168 = vsel %vm155, %v166, %v161
    %169 = vrot.lane.b32.xlu0 %v158, 64
    %v170 = vpop.permute.xlu0 %169
    %171 = vrot.lane.b32.xlu0 %v160, 64
    %v172 = vpop.permute.xlu0 %171
    %173 = vrot.lane.b32.xlu0 %v162, 64
    %v174 = vpop.permute.xlu0 %173
    %175 = vrot.lane.b32.xlu0 %v165, 64
    %v176 = vpop.permute.xlu0 %175
    %177 = vrot.lane.b32.xlu0 %v167, 64
    %v178 = vpop.permute.xlu0 %177
    %179 = vrot.lane.b32.xlu0 %v168, 64
    %v180 = vpop.permute.xlu0 %179
    %vm187 = vcmask 1044480
    %v188 = vrot.slane %v114, 3
    %v189 = vrot.slane %v104, 3
    %v190 = vsel %vm187, %v188, %v189
    %v191 = vrot.slane %v116, 3
    %v192 = vsel %vm187, %v189, %v191
    %v193 = vrot.slane 0.0, 3
    %v194 = vsel %vm187, %v191, %v193
    %v195 = vrot.slane %v115, 3
    %v196 = vrot.slane %v107, 3
    %v197 = vsel %vm187, %v195, %v196
    %v198 = vrot.slane %v117, 3
    %v199 = vsel %vm187, %v196, %v198
    %v200 = vsel %vm187, %v198, %v193
    %201 = vrot.lane.b32.xlu0 %v190, 96
    %v202 = vpop.permute.xlu0 %201
    %203 = vrot.lane.b32.xlu0 %v192, 96
    %v204 = vpop.permute.xlu0 %203
    %205 = vrot.lane.b32.xlu0 %v194, 96
    %v206 = vpop.permute.xlu0 %205
    %207 = vrot.lane.b32.xlu0 %v197, 96
    %v208 = vpop.permute.xlu0 %207
    %209 = vrot.lane.b32.xlu0 %v199, 96
    %v210 = vpop.permute.xlu0 %209
    %211 = vrot.lane.b32.xlu0 %v200, 96
    %v212 = vpop.permute.xlu0 %211
    %v219 = vrot.slane %v114, 4
    %v220 = vrot.slane %v104, 4
    %v221 = vsel %vm101, %v219, %v220
    %v222 = vrot.slane %v116, 4
    %v223 = vsel %vm101, %v220, %v222
    %v224 = vrot.slane 0.0, 4
    %v225 = vsel %vm101, %v222, %v224
    %v226 = vrot.slane %v115, 4
    %v227 = vrot.slane %v107, 4
    %v228 = vsel %vm101, %v226, %v227
    %v229 = vrot.slane %v117, 4
    %v230 = vsel %vm101, %v227, %v229
    %v231 = vsel %vm101, %v229, %v224
    %vm238 = vcmask 1042432
    %v239 = vrot.slane %v114, 5
    %v240 = vrot.slane %v104, 5
    %v241 = vsel %vm238, %v239, %v240
    %v242 = vrot.slane %v116, 5
    %v243 = vsel %vm238, %v240, %v242
    %v244 = vrot.slane 0.0, 5
    %v245 = vsel %vm238, %v242, %v244
    %v246 = vrot.slane %v115, 5
    %v247 = vrot.slane %v107, 5
    %v248 = vsel %vm238, %v246, %v247
    %v249 = vrot.slane %v117, 5
    %v250 = vsel %vm238, %v247, %v249
    %v251 = vsel %vm238, %v249, %v244
    %252 = vrot.lane.b32.xlu0 %v241, 32
    %v253 = vpop.permute.xlu0 %252
    %254 = vrot.lane.b32.xlu0 %v243, 32
    %v255 = vpop.permute.xlu0 %254
    %256 = vrot.lane.b32.xlu0 %v245, 32
    %v257 = vpop.permute.xlu0 %256
    %258 = vrot.lane.b32.xlu0 %v248, 32
    %v259 = vpop.permute.xlu0 %258
    %260 = vrot.lane.b32.xlu0 %v250, 32
    %v261 = vpop.permute.xlu0 %260
    %262 = vrot.lane.b32.xlu0 %v251, 32
    %v263 = vpop.permute.xlu0 %262
    %vm270 = vcmask 1041408
    %v271 = vrot.slane %v114, 6
    %v272 = vrot.slane %v104, 6
    %v273 = vsel %vm270, %v271, %v272
    %v274 = vrot.slane %v116, 6
    %v275 = vsel %vm270, %v272, %v274
    %v276 = vrot.slane 0.0, 6
    %v277 = vsel %vm270, %v274, %v276
    %v278 = vrot.slane %v115, 6
    %v279 = vrot.slane %v107, 6
    %v280 = vsel %vm270, %v278, %v279
    %v281 = vrot.slane %v117, 6
    %v282 = vsel %vm270, %v279, %v281
    %v283 = vsel %vm270, %v281, %v276
    %284 = vrot.lane.b32.xlu0 %v273, 64
    %v285 = vpop.permute.xlu0 %284
    %286 = vrot.lane.b32.xlu0 %v275, 64
    %v287 = vpop.permute.xlu0 %286
    %288 = vrot.lane.b32.xlu0 %v277, 64
    %v289 = vpop.permute.xlu0 %288
    %290 = vrot.lane.b32.xlu0 %v280, 64
    %v291 = vpop.permute.xlu0 %290
    %292 = vrot.lane.b32.xlu0 %v282, 64
    %v293 = vpop.permute.xlu0 %292
    %294 = vrot.lane.b32.xlu0 %v283, 64
    %v295 = vpop.permute.xlu0 %294
    %vm302 = vcmask 1040384
    %v303 = vrot.slane %v114, 7
    %v304 = vrot.slane %v104, 7
    %v305 = vsel %vm302, %v303, %v304
    %v306 = vrot.slane %v116, 7
    %v307 = vsel %vm302, %v304, %v306
    %v308 = vrot.slane 0.0, 7
    %v309 = vsel %vm302, %v306, %v308
    %v310 = vrot.slane %v115, 7
    %v311 = vrot.slane %v107, 7
    %v312 = vsel %vm302, %v310, %v311
    %v313 = vrot.slane %v117, 7
    %v314 = vsel %vm302, %v311, %v313
    %v315 = vsel %vm302, %v313, %v308
    %316 = vrot.lane.b32.xlu0 %v305, 96
    %v317 = vpop.permute.xlu0 %316
    %318 = vrot.lane.b32.xlu0 %v307, 96
    %v319 = vpop.permute.xlu0 %318
    %320 = vrot.lane.b32.xlu0 %v309, 96
    %v321 = vpop.permute.xlu0 %320
    %322 = vrot.lane.b32.xlu0 %v312, 96
    %v323 = vpop.permute.xlu0 %322
    %324 = vrot.lane.b32.xlu0 %v314, 96
    %v325 = vpop.permute.xlu0 %324
    %326 = vrot.lane.b32.xlu0 %v315, 96
    %v327 = vpop.permute.xlu0 %326
    %vm334 = vcmask 261120
    %v335 = vsel %vm334, %v114, %v138
    %v336 = vsel %vm334, %v104, %v140
    %v337 = vsel %vm334, %v116, %v142
    %v338 = vsel %vm334, %v115, %v144
    %v339 = vsel %vm334, %v107, %v146
    %v340 = vsel %vm334, %v117, %v148
    %vm341 = vcmask 523264
    %v342 = vsel %vm341, %v335, %v170
    %v343 = vsel %vm341, %v336, %v172
    %v344 = vsel %vm341, %v337, %v174
    %v345 = vsel %vm341, %v338, %v176
    %v346 = vsel %vm341, %v339, %v178
    %v347 = vsel %vm341, %v340, %v180
    %vm348 = vcmask 785408
    %v349 = vsel %vm348, %v342, %v202
    %v350 = vsel %vm348, %v343, %v204
    %v351 = vsel %vm348, %v344, %v206
    %v352 = vsel %vm348, %v345, %v208
    %v353 = vsel %vm348, %v346, %v210
    %v354 = vsel %vm348, %v347, %v212
    %v355 = vsel %vm334, %v221, %v253
    %v356 = vsel %vm334, %v223, %v255
    %v357 = vsel %vm334, %v225, %v257
    %v358 = vsel %vm334, %v228, %v259
    %v359 = vsel %vm334, %v230, %v261
    %v360 = vsel %vm334, %v231, %v263
    %v361 = vsel %vm341, %v355, %v285
    %v362 = vsel %vm341, %v356, %v287
    %v363 = vsel %vm341, %v357, %v289
    %v364 = vsel %vm341, %v358, %v291
    %v365 = vsel %vm341, %v359, %v293
    %v366 = vsel %vm341, %v360, %v295
    %v367 = vsel %vm348, %v361, %v317
    %v368 = vsel %vm348, %v362, %v319
    %v369 = vsel %vm348, %v363, %v321
    %v370 = vsel %vm348, %v364, %v323
    %v371 = vsel %vm348, %v365, %v325
    %v372 = vsel %vm348, %v366, %v327
    %v373 = vld [vmem:[%s1] sm:$0xff]
    %v374 = vld [vmem:[%s1 + $0x8] sm:$0xff]
    %v375 = vld [vmem:[%s1 + $0x10] sm:$0xff]
    %v376 = vld [vmem:[%s1 + $0x18] sm:$0xff]
    %v377 = vld [vmem:[%s1 + $0x20] sm:$0xff]
    %v378 = vld [vmem:[%s1 + $0x28] sm:$0xff]
    %v379 = vld [vmem:[%s1 + $0x30] sm:$0xff]
    %v380 = vld [vmem:[%s1 + $0x38] sm:$0xff]
    %v381 = vld [vmem:[%s1 + $0x40] sm:$0xff]
    %v382 = vld [vmem:[%s1 + $0x48] sm:$0xff]
    %v383 = vld [vmem:[%s1 + $0x50] sm:$0xff]
    %v384 = vld [vmem:[%s1 + $0x58] sm:$0xff]
    %v385 = vld [vmem:[%s1 + $0x60] sm:$0xff]
    %v386 = vld [vmem:[%s1 + $0x68] sm:$0xff]
    %v387 = vld [vmem:[%s1 + $0x70] sm:$0xff]
    %v388 = vld [vmem:[%s1 + $0x78] sm:$0xff]
    %v389 = vld [vmem:[%s1 + $0x80] sm:$0xff]
    %v390 = vld [vmem:[%s1 + $0x88] sm:$0xff]
    %v391 = vld [vmem:[%s1 + $0x90] sm:$0xff]
    %v392 = vld [vmem:[%s1 + $0x98] sm:$0xff]
    %v393 = vld [vmem:[%s1 + $0xa0] sm:$0xff]
    %v394 = vld [vmem:[%s1 + $0xa8] sm:$0xff]
    %v395 = vld [vmem:[%s1 + $0xb0] sm:$0xff]
    %v396 = vld [vmem:[%s1 + $0xb8] sm:$0xff]
    %v397 = vld [vmem:[%s1 + $0xc0] sm:$0xff]
    %v398 = vld [vmem:[%s1 + $0xc8] sm:$0xff]
    %v399 = vld [vmem:[%s1 + $0xd0] sm:$0xff]
    %v400 = vld [vmem:[%s1 + $0xd8] sm:$0xff]
    %v401 = vld [vmem:[%s1 + $0xe0] sm:$0xff]
    %v402 = vld [vmem:[%s1 + $0xe8] sm:$0xff]
    %v403 = vld [vmem:[%s1 + $0xf0] sm:$0xff]
    %v404 = vld [vmem:[%s1 + $0xf8] sm:$0xff]
    %v405 = vld [vmem:[%s2] sm:$0x1]
    %v407 = vlaneseq
    %v408 = vshrl.u32 %v407, 7
    %v409 = vsub.s32 0, %v408
    %v410 = vrot.slane %v405, %v409
    %412 = vmatprep.subr.mxu0 0.0
    %413 = vmatpush1.msra.mxu0 %v373
    %414 = vmatprep.subr.mxu0 0.0
    %415 = vmatpush1.msra.mxu0 %v374
    %416 = vmatprep.subr.mxu0 0.0
    %417 = vmatpush1.msra.mxu0 %v375
    %418 = vmatprep.subr.mxu0 0.0
    %419 = vmatpush1.msra.mxu0 %v376
    %420 = vmatprep.subr.mxu0 0.0
    %421 = vmatpush1.msra.mxu0 %v377
    %422 = vmatprep.subr.mxu0 0.0
    %423 = vmatpush1.msra.mxu0 %v378
    %424 = vmatprep.subr.mxu0 0.0
    %425 = vmatpush1.msra.mxu0 %v379
    %426 = vmatprep.subr.mxu0 0.0
    %427 = vmatpush1.msra.mxu0 %v380
    %428 = vmatprep.subr.mxu0 0.0
    %429 = vmatpush1.msra.mxu0 %v381
    %430 = vmatprep.subr.mxu0 0.0
    %431 = vmatpush1.msra.mxu0 %v382
    %432 = vmatprep.subr.mxu0 0.0
    %433 = vmatpush1.msra.mxu0 %v383
    %434 = vmatprep.subr.mxu0 0.0
    %435 = vmatpush1.msra.mxu0 %v384
    %436 = vmatprep.subr.mxu0 0.0
    %437 = vmatpush1.msra.mxu0 %v385
    %438 = vmatprep.subr.mxu0 0.0
    %439 = vmatpush1.msra.mxu0 %v386
    %440 = vmatprep.subr.mxu0 0.0
    %441 = vmatpush1.msra.mxu0 %v387
    %442 = vmatprep.subr.mxu0 0.0
    %443 = vmatpush1.msra.mxu0 %v388
    %444 = vmatprep.subr.mxu0 0.0
    %445 = vmatpush1.msra.mxu0 %v389
    %446 = vmatprep.subr.mxu0 0.0
    %447 = vmatpush1.msra.mxu0 %v390
    %448 = vmatprep.subr.mxu0 0.0
    %449 = vmatpush1.msra.mxu0 %v391
    %450 = vmatprep.subr.mxu0 0.0
    %451 = vmatpush1.msra.mxu0 %v392
    %452 = vmatprep.subr.mxu0 0.0
    %453 = vmatpush1.msra.mxu0 %v393
    %454 = vmatprep.subr.mxu0 0.0
    %455 = vmatpush1.msra.mxu0 %v394
    %456 = vmatprep.subr.mxu0 0.0
    %457 = vmatpush1.msra.mxu0 %v395
    %458 = vmatprep.subr.mxu0 0.0
    %459 = vmatpush1.msra.mxu0 %v396
    %460 = vmatprep.subr.mxu0 0.0
    %461 = vmatpush1.msra.mxu0 %v397
    %462 = vmatprep.subr.mxu0 0.0
    %463 = vmatpush1.msra.mxu0 %v398
    %464 = vmatprep.subr.mxu0 0.0
    %465 = vmatpush1.msra.mxu0 %v399
    %466 = vmatprep.subr.mxu0 0.0
    %467 = vmatpush1.msra.mxu0 %v400
    %468 = vmatprep.subr.mxu0 0.0
    %469 = vmatpush1.msra.mxu0 %v401
    %470 = vmatprep.subr.mxu0 0.0
    %471 = vmatpush1.msra.mxu0 %v402
    %472 = vmatprep.subr.mxu0 0.0
    %473 = vmatpush1.msra.mxu0 %v403
    %474 = vmatprep.subr.mxu0 0.0
    %475 = vmatpush1.msra.mxu0 %v404
    %476 = vmatprep.mubr.f32.mxu0 %v367
    %477 = vmatmul.mubr.f32.gmra.mrb[0].mxu0 %v349
    %v478 = vpop.f32.mrb[0].mxu0
    %v479 = vadd.f32 %v410, %v478
    %v480 = vpop.f32.mrb[0].mxu0
    %481 = vmatprep.mubr.f32.mxu0 %v368
    %482 = vmatmul.mubr.f32.gmra.mrb[0].mxu0 %v350
    %v483 = vpop.f32.mrb[0].mxu0
    %v484 = vadd.f32 %v410, %v483
    %v485 = vpop.f32.mrb[0].mxu0
    %486 = vmatprep.mubr.f32.mxu0 %v369
    %487 = vmatmul.mubr.f32.gmra.mrb[0].mxu0 %v351
    %v488 = vpop.f32.mrb[0].mxu0
    %v489 = vadd.f32 %v410, %v488
    %v490 = vpop.f32.mrb[0].mxu0
    %491 = vmatprep.mubr.f32.mxu0 %v370
    %492 = vmatmul.mubr.f32.gmra.mrb[0].mxu0 %v352
    %v493 = vpop.f32.mrb[0].mxu0
    %v494 = vadd.f32 %v410, %v493
    %v495 = vpop.f32.mrb[0].mxu0
    %496 = vmatprep.mubr.f32.mxu0 %v371
    %497 = vmatmul.mubr.f32.gmra.mrb[0].mxu0 %v353
    %v498 = vpop.f32.mrb[0].mxu0
    %v499 = vadd.f32 %v410, %v498
    %v500 = vpop.f32.mrb[0].mxu0
    %501 = vmatprep.mubr.f32.mxu0 %v372
    %502 = vmatmul.mubr.f32.gmra.mrb[0].mxu0 %v354
    %v503 = vpop.f32.mrb[0].mxu0
    %v504 = vadd.f32 %v410, %v503
    %v505 = vpop.f32.mrb[0].mxu0
    %506 = vdwg.mxu0
    %v507 = vlaneseq
    %v508 = vshrl.u32 %v507, 7
    %v509 = vadd.s32 %v508, 8
    %v510 = vadd.s32 %v508, 16
    %vm511 = vcmp.ge.s32.totalorder %v508, 2
    %vm512 = vcmp.ge.s32.totalorder %v509, 2
    %vm513 = vcmp.ge.s32.totalorder %v510, 2
    %vm514 = vcmp.lt.s32.totalorder %v508, 18
    %vm515 = vcmp.lt.s32.totalorder %v509, 18
    %vm516 = vcmp.lt.s32.totalorder %v510, 18
    %vm517 = vmand %vm511, %vm514
    %vm518 = vmand %vm512, %vm515
    %vm519 = vmand %vm513, %vm516
    %v520 = vsel %vm517, 1, 0
    %v521 = vsel %vm518, 1, 0
    %v522 = vsel %vm519, 1, 0
    %vm523 = vcmp.eq.s32.totalorder %v520, 1
    %vm524 = vcmp.eq.s32.totalorder %v521, 1
    %vm525 = vcmp.eq.s32.totalorder %v522, 1
    %v526 = vsel %vm523, %v479, 0.0
    %v527 = vsel %vm524, %v484, 0.0
    %v528 = vsel %vm525, %v489, 0.0
    %v529 = vsel %vm523, %v494, 0.0
    %v530 = vsel %vm524, %v499, 0.0
    %v531 = vsel %vm525, %v504, 0.0
    %v538 = vrot.slane %v526, 1
    %v539 = vrot.slane %v527, 1
    %v540 = vsel %vm123, %v538, %v539
    %v541 = vrot.slane %v528, 1
    %v542 = vsel %vm123, %v539, %v541
    %v543 = vrot.slane %v529, 1
    %v544 = vrot.slane %v530, 1
    %v545 = vsel %vm123, %v543, %v544
    %v546 = vrot.slane %v531, 1
    %v547 = vsel %vm123, %v544, %v546
    %548 = vrot.lane.b32.xlu0 %v540, 32
    %v549 = vpop.permute.xlu0 %548
    %550 = vrot.lane.b32.xlu0 %v542, 32
    %v551 = vpop.permute.xlu0 %550
    %552 = vrot.lane.b32.xlu0 %v545, 32
    %v553 = vpop.permute.xlu0 %552
    %554 = vrot.lane.b32.xlu0 %v547, 32
    %v555 = vpop.permute.xlu0 %554
    %v560 = vrot.slane %v526, 2
    %v561 = vrot.slane %v527, 2
    %v562 = vsel %vm155, %v560, %v561
    %v563 = vrot.slane %v528, 2
    %v564 = vsel %vm155, %v561, %v563
    %v565 = vrot.slane %v529, 2
    %v566 = vrot.slane %v530, 2
    %v567 = vsel %vm155, %v565, %v566
    %v568 = vrot.slane %v531, 2
    %v569 = vsel %vm155, %v566, %v568
    %570 = vrot.lane.b32.xlu0 %v562, 64
    %v571 = vpop.permute.xlu0 %570
    %572 = vrot.lane.b32.xlu0 %v564, 64
    %v573 = vpop.permute.xlu0 %572
    %574 = vrot.lane.b32.xlu0 %v567, 64
    %v575 = vpop.permute.xlu0 %574
    %576 = vrot.lane.b32.xlu0 %v569, 64
    %v577 = vpop.permute.xlu0 %576
    %v582 = vrot.slane %v526, 3
    %v583 = vrot.slane %v527, 3
    %v584 = vsel %vm187, %v582, %v583
    %v585 = vrot.slane %v528, 3
    %v586 = vsel %vm187, %v583, %v585
    %v587 = vrot.slane %v529, 3
    %v588 = vrot.slane %v530, 3
    %v589 = vsel %vm187, %v587, %v588
    %v590 = vrot.slane %v531, 3
    %v591 = vsel %vm187, %v588, %v590
    %592 = vrot.lane.b32.xlu0 %v584, 96
    %v593 = vpop.permute.xlu0 %592
    %594 = vrot.lane.b32.xlu0 %v586, 96
    %v595 = vpop.permute.xlu0 %594
    %596 = vrot.lane.b32.xlu0 %v589, 96
    %v597 = vpop.permute.xlu0 %596
    %598 = vrot.lane.b32.xlu0 %v591, 96
    %v599 = vpop.permute.xlu0 %598
    %v604 = vrot.slane %v526, 4
    %v605 = vrot.slane %v527, 4
    %v606 = vsel %vm101, %v604, %v605
    %v607 = vrot.slane %v528, 4
    %v608 = vsel %vm101, %v605, %v607
    %v609 = vrot.slane %v529, 4
    %v610 = vrot.slane %v530, 4
    %v611 = vsel %vm101, %v609, %v610
    %v612 = vrot.slane %v531, 4
    %v613 = vsel %vm101, %v610, %v612
    %v618 = vrot.slane %v526, 5
    %v619 = vrot.slane %v527, 5
    %v620 = vsel %vm238, %v618, %v619
    %v621 = vrot.slane %v528, 5
    %v622 = vsel %vm238, %v619, %v621
    %v623 = vrot.slane %v529, 5
    %v624 = vrot.slane %v530, 5
    %v625 = vsel %vm238, %v623, %v624
    %v626 = vrot.slane %v531, 5
    %v627 = vsel %vm238, %v624, %v626
    %628 = vrot.lane.b32.xlu0 %v620, 32
    %v629 = vpop.permute.xlu0 %628
    %630 = vrot.lane.b32.xlu0 %v622, 32
    %v631 = vpop.permute.xlu0 %630
    %632 = vrot.lane.b32.xlu0 %v625, 32
    %v633 = vpop.permute.xlu0 %632
    %634 = vrot.lane.b32.xlu0 %v627, 32
    %v635 = vpop.permute.xlu0 %634
    %v640 = vrot.slane %v526, 6
    %v641 = vrot.slane %v527, 6
    %v642 = vsel %vm270, %v640, %v641
    %v643 = vrot.slane %v528, 6
    %v644 = vsel %vm270, %v641, %v643
    %v645 = vrot.slane %v529, 6
    %v646 = vrot.slane %v530, 6
    %v647 = vsel %vm270, %v645, %v646
    %v648 = vrot.slane %v531, 6
    %v649 = vsel %vm270, %v646, %v648
    %650 = vrot.lane.b32.xlu0 %v642, 64
    %v651 = vpop.permute.xlu0 %650
    %652 = vrot.lane.b32.xlu0 %v644, 64
    %v653 = vpop.permute.xlu0 %652
    %654 = vrot.lane.b32.xlu0 %v647, 64
    %v655 = vpop.permute.xlu0 %654
    %656 = vrot.lane.b32.xlu0 %v649, 64
    %v657 = vpop.permute.xlu0 %656
    %v662 = vrot.slane %v526, 7
    %v663 = vrot.slane %v527, 7
    %v664 = vsel %vm302, %v662, %v663
    %v665 = vrot.slane %v528, 7
    %v666 = vsel %vm302, %v663, %v665
    %v667 = vrot.slane %v529, 7
    %v668 = vrot.slane %v530, 7
    %v669 = vsel %vm302, %v667, %v668
    %v670 = vrot.slane %v531, 7
    %v671 = vsel %vm302, %v668, %v670
    %672 = vrot.lane.b32.xlu0 %v664, 96
    %v673 = vpop.permute.xlu0 %672
    %674 = vrot.lane.b32.xlu0 %v666, 96
    %v675 = vpop.permute.xlu0 %674
    %676 = vrot.lane.b32.xlu0 %v669, 96
    %v677 = vpop.permute.xlu0 %676
    %678 = vrot.lane.b32.xlu0 %v671, 96
    %v679 = vpop.permute.xlu0 %678
    %v684 = vsel %vm334, %v526, %v549
    %v685 = vsel %vm334, %v527, %v551
    %v686 = vsel %vm334, %v529, %v553
    %v687 = vsel %vm334, %v530, %v555
    %v688 = vsel %vm341, %v684, %v571
    %v689 = vsel %vm341, %v685, %v573
    %v690 = vsel %vm341, %v686, %v575
    %v691 = vsel %vm341, %v687, %v577
    %v692 = vsel %vm348, %v688, %v593
    %v693 = vsel %vm348, %v689, %v595
    %v694 = vsel %vm348, %v690, %v597
    %v695 = vsel %vm348, %v691, %v599
    %v696 = vsel %vm334, %v606, %v629
    %v697 = vsel %vm334, %v608, %v631
    %v698 = vsel %vm334, %v611, %v633
    %v699 = vsel %vm334, %v613, %v635
    %v700 = vsel %vm341, %v696, %v651
    %v701 = vsel %vm341, %v697, %v653
    %v702 = vsel %vm341, %v698, %v655
    %v703 = vsel %vm341, %v699, %v657
    %v704 = vsel %vm348, %v700, %v673
    %v705 = vsel %vm348, %v701, %v675
    %v706 = vsel %vm348, %v702, %v677
    %v707 = vsel %vm348, %v703, %v679
    %v708 = vld [vmem:[%s3] sm:$0xff]
    %v709 = vld [vmem:[%s3 + $0x8] sm:$0xff]
    %v710 = vld [vmem:[%s3 + $0x10] sm:$0xff]
    %v711 = vld [vmem:[%s3 + $0x18] sm:$0xff]
    %v712 = vld [vmem:[%s3 + $0x20] sm:$0xff]
    %v713 = vld [vmem:[%s3 + $0x28] sm:$0xff]
    %v714 = vld [vmem:[%s3 + $0x30] sm:$0xff]
    %v715 = vld [vmem:[%s3 + $0x38] sm:$0xff]
    %v716 = vld [vmem:[%s3 + $0x40] sm:$0xff]
    %v717 = vld [vmem:[%s3 + $0x48] sm:$0xff]
    %v718 = vld [vmem:[%s3 + $0x50] sm:$0xff]
    %v719 = vld [vmem:[%s3 + $0x58] sm:$0xff]
    %v720 = vld [vmem:[%s3 + $0x60] sm:$0xff]
    %v721 = vld [vmem:[%s3 + $0x68] sm:$0xff]
    %v722 = vld [vmem:[%s3 + $0x70] sm:$0xff]
    %v723 = vld [vmem:[%s3 + $0x78] sm:$0xff]
    %v724 = vld [vmem:[%s3 + $0x80] sm:$0xff]
    %v725 = vld [vmem:[%s3 + $0x88] sm:$0xff]
    %v726 = vld [vmem:[%s3 + $0x90] sm:$0xff]
    %v727 = vld [vmem:[%s3 + $0x98] sm:$0xff]
    %v728 = vld [vmem:[%s3 + $0xa0] sm:$0xff]
    %v729 = vld [vmem:[%s3 + $0xa8] sm:$0xff]
    %v730 = vld [vmem:[%s3 + $0xb0] sm:$0xff]
    %v731 = vld [vmem:[%s3 + $0xb8] sm:$0xff]
    %v732 = vld [vmem:[%s3 + $0xc0] sm:$0xff]
    %v733 = vld [vmem:[%s3 + $0xc8] sm:$0xff]
    %v734 = vld [vmem:[%s3 + $0xd0] sm:$0xff]
    %v735 = vld [vmem:[%s3 + $0xd8] sm:$0xff]
    %v736 = vld [vmem:[%s3 + $0xe0] sm:$0xff]
    %v737 = vld [vmem:[%s3 + $0xe8] sm:$0xff]
    %v738 = vld [vmem:[%s3 + $0xf0] sm:$0xff]
    %v739 = vld [vmem:[%s3 + $0xf8] sm:$0xff]
    %v740 = vld [vmem:[%s4] sm:$0x1]
    %v742 = vlaneseq
    %v743 = vshrl.u32 %v742, 7
    %v744 = vsub.s32 0, %v743
    %v745 = vrot.slane %v740, %v744
    %747 = vmatprep.subr.mxu0 0.0
    %748 = vmatpush1.msra.mxu0 %v708
    %749 = vmatprep.subr.mxu0 0.0
    %750 = vmatpush1.msra.mxu0 %v709
    %751 = vmatprep.subr.mxu0 0.0
    %752 = vmatpush1.msra.mxu0 %v710
    %753 = vmatprep.subr.mxu0 0.0
    %754 = vmatpush1.msra.mxu0 %v711
    %755 = vmatprep.subr.mxu0 0.0
    %756 = vmatpush1.msra.mxu0 %v712
    %757 = vmatprep.subr.mxu0 0.0
    %758 = vmatpush1.msra.mxu0 %v713
    %759 = vmatprep.subr.mxu0 0.0
    %760 = vmatpush1.msra.mxu0 %v714
    %761 = vmatprep.subr.mxu0 0.0
    %762 = vmatpush1.msra.mxu0 %v715
    %763 = vmatprep.subr.mxu0 0.0
    %764 = vmatpush1.msra.mxu0 %v716
    %765 = vmatprep.subr.mxu0 0.0
    %766 = vmatpush1.msra.mxu0 %v717
    %767 = vmatprep.subr.mxu0 0.0
    %768 = vmatpush1.msra.mxu0 %v718
    %769 = vmatprep.subr.mxu0 0.0
    %770 = vmatpush1.msra.mxu0 %v719
    %771 = vmatprep.subr.mxu0 0.0
    %772 = vmatpush1.msra.mxu0 %v720
    %773 = vmatprep.subr.mxu0 0.0
    %774 = vmatpush1.msra.mxu0 %v721
    %775 = vmatprep.subr.mxu0 0.0
    %776 = vmatpush1.msra.mxu0 %v722
    %777 = vmatprep.subr.mxu0 0.0
    %778 = vmatpush1.msra.mxu0 %v723
    %779 = vmatprep.subr.mxu0 0.0
    %780 = vmatpush1.msra.mxu0 %v724
    %781 = vmatprep.subr.mxu0 0.0
    %782 = vmatpush1.msra.mxu0 %v725
    %783 = vmatprep.subr.mxu0 0.0
    %784 = vmatpush1.msra.mxu0 %v726
    %785 = vmatprep.subr.mxu0 0.0
    %786 = vmatpush1.msra.mxu0 %v727
    %787 = vmatprep.subr.mxu0 0.0
    %788 = vmatpush1.msra.mxu0 %v728
    %789 = vmatprep.subr.mxu0 0.0
    %790 = vmatpush1.msra.mxu0 %v729
    %791 = vmatprep.subr.mxu0 0.0
    %792 = vmatpush1.msra.mxu0 %v730
    %793 = vmatprep.subr.mxu0 0.0
    %794 = vmatpush1.msra.mxu0 %v731
    %795 = vmatprep.subr.mxu0 0.0
    %796 = vmatpush1.msra.mxu0 %v732
    %797 = vmatprep.subr.mxu0 0.0
    %798 = vmatpush1.msra.mxu0 %v733
    %799 = vmatprep.subr.mxu0 0.0
    %800 = vmatpush1.msra.mxu0 %v734
    %801 = vmatprep.subr.mxu0 0.0
    %802 = vmatpush1.msra.mxu0 %v735
    %803 = vmatprep.subr.mxu0 0.0
    %804 = vmatpush1.msra.mxu0 %v736
    %805 = vmatprep.subr.mxu0 0.0
    %806 = vmatpush1.msra.mxu0 %v737
    %807 = vmatprep.subr.mxu0 0.0
    %808 = vmatpush1.msra.mxu0 %v738
    %809 = vmatprep.subr.mxu0 0.0
    %810 = vmatpush1.msra.mxu0 %v739
    %811 = vmatprep.mubr.f32.mxu0 %v704
    %812 = vmatmul.mubr.f32.gmra.mrb[0].mxu0 %v692
    %v813 = vpop.f32.mrb[0].mxu0
    %v814 = vadd.f32 %v745, %v813
    %v815 = vpop.f32.mrb[0].mxu0
    %816 = vmatprep.mubr.f32.mxu0 %v705
    %817 = vmatmul.mubr.f32.gmra.mrb[0].mxu0 %v693
    %v818 = vpop.f32.mrb[0].mxu0
    %v819 = vadd.f32 %v745, %v818
    %v820 = vpop.f32.mrb[0].mxu0
    %821 = vmatprep.mubr.f32.mxu0 %v706
    %822 = vmatmul.mubr.f32.gmra.mrb[0].mxu0 %v694
    %v823 = vpop.f32.mrb[0].mxu0
    %v824 = vadd.f32 %v745, %v823
    %v825 = vpop.f32.mrb[0].mxu0
    %826 = vmatprep.mubr.f32.mxu0 %v707
    %827 = vmatmul.mubr.f32.gmra.mrb[0].mxu0 %v695
    %v828 = vpop.f32.mrb[0].mxu0
    %v829 = vadd.f32 %v745, %v828
    %v830 = vpop.f32.mrb[0].mxu0
    %831 = vdwg.mxu0
    %v832 = vld [vmem:[%s5] sm:$0xff]
    %v833 = vld [vmem:[%s5 + $0x8] sm:$0xff]
    %v834 = vld [vmem:[%s5 + $0x10] sm:$0xff]
    %v835 = vld [vmem:[%s5 + $0x18] sm:$0xff]
    %836 = vxpose.xlu0.b32.start [1/16] %v832, 128
    %837 = vxpose.xlu0.b32.cont [2/16] %v833, 128
    %838 = vxpose.xlu0.b32.cont [3/16] %v834, 128
    %839 = vxpose.xlu0.b32.cont [4/16] %v835, 128
    %840 = vxpose.xlu0.b32.cont [5/16] 0.0, 128
    %841 = vxpose.xlu0.b32.cont [6/16] 0.0, 128
    %842 = vxpose.xlu0.b32.cont [7/16] 0.0, 128
    %843 = vxpose.xlu0.b32.cont [8/16] 0.0, 128
    %844 = vxpose.xlu0.b32.cont [9/16] 0.0, 128
    %845 = vxpose.xlu0.b32.cont [10/16] 0.0, 128
    %846 = vxpose.xlu0.b32.cont [11/16] 0.0, 128
    %847 = vxpose.xlu0.b32.cont [12/16] 0.0, 128
    %848 = vxpose.xlu0.b32.cont [13/16] 0.0, 128
    %849 = vxpose.xlu0.b32.cont [14/16] 0.0, 128
    %850 = vxpose.xlu0.b32.cont [15/16] 0.0, 128
    %851 = vxpose.xlu0.b32.end [16/16] 0.0, 128
    %v852 = vpop.trf.xlu0
    %v853 = vpop.trf.xlu0
    %v854 = vpop.trf.xlu0
    %v855 = vpop.trf.xlu0
    %v856 = vpop.trf.xlu0
    %v857 = vpop.trf.xlu0
    %v858 = vpop.trf.xlu0
    %v859 = vpop.trf.xlu0
    %v860 = vpop.trf.xlu0
    %v861 = vpop.trf.xlu0
    %v862 = vpop.trf.xlu0
    %v863 = vpop.trf.xlu0
    %v864 = vpop.trf.xlu0
    %v865 = vpop.trf.xlu0
    %v866 = vpop.trf.xlu0
    %v867 = vpop.trf.xlu0
    %s868 = scalar_lea.vmem %s5, 32
    %v869 = vld [vmem:[%s868] sm:$0xff]
    %v870 = vld [vmem:[%s868 + $0x8] sm:$0xff]
    %v871 = vld [vmem:[%s868 + $0x10] sm:$0xff]
    %v872 = vld [vmem:[%s868 + $0x18] sm:$0xff]
    %873 = vxpose.xlu0.b32.start [1/16] %v869, 128
    %874 = vxpose.xlu0.b32.cont [2/16] %v870, 128
    %875 = vxpose.xlu0.b32.cont [3/16] %v871, 128
    %876 = vxpose.xlu0.b32.cont [4/16] %v872, 128
    %877 = vxpose.xlu0.b32.cont [5/16] 0.0, 128
    %878 = vxpose.xlu0.b32.cont [6/16] 0.0, 128
    %879 = vxpose.xlu0.b32.cont [7/16] 0.0, 128
    %880 = vxpose.xlu0.b32.cont [8/16] 0.0, 128
    %881 = vxpose.xlu0.b32.cont [9/16] 0.0, 128
    %882 = vxpose.xlu0.b32.cont [10/16] 0.0, 128
    %883 = vxpose.xlu0.b32.cont [11/16] 0.0, 128
    %884 = vxpose.xlu0.b32.cont [12/16] 0.0, 128
    %885 = vxpose.xlu0.b32.cont [13/16] 0.0, 128
    %886 = vxpose.xlu0.b32.cont [14/16] 0.0, 128
    %887 = vxpose.xlu0.b32.cont [15/16] 0.0, 128
    %888 = vxpose.xlu0.b32.end [16/16] 0.0, 128
    %v889 = vpop.trf.xlu0
    %v890 = vpop.trf.xlu0
    %v891 = vpop.trf.xlu0
    %v892 = vpop.trf.xlu0
    %v893 = vpop.trf.xlu0
    %v894 = vpop.trf.xlu0
    %v895 = vpop.trf.xlu0
    %v896 = vpop.trf.xlu0
    %v897 = vpop.trf.xlu0
    %v898 = vpop.trf.xlu0
    %v899 = vpop.trf.xlu0
    %v900 = vpop.trf.xlu0
    %v901 = vpop.trf.xlu0
    %v902 = vpop.trf.xlu0
    %v903 = vpop.trf.xlu0
    %v904 = vpop.trf.xlu0
    %v905 = vadd.f32 %v814, %v852
    %v906 = vadd.f32 %v819, %v853
    %v907 = vadd.f32 %v824, %v889
    %v908 = vadd.f32 %v829, %v890
    %v909 = vmax.f32 %v905, 0.0
    %v910 = vmax.f32 %v906, 0.0
    %v911 = vmax.f32 %v907, 0.0
    %v912 = vmax.f32 %v908, 0.0
    %v917 = vcombine.high %v909, %v909
    %v919 = vunpack.c.l.s4 1983009808
    %v920 = vunpack.c.0.s8 %v919
    %v921 = vlaneseq
    %v922 = vshrl.u32 %v921, 7
    %v923 = vsub.s32 %v920, %v922
    %v924 = vrot.slane %v909, %v923
    %v926 = vunpack.c.l.s4 1983009808
    %v927 = vunpack.c.0.s8 %v926
    %v928 = vlaneseq
    %v929 = vshrl.u32 %v928, 7
    %v930 = vsub.s32 %v927, %v929
    %v931 = vrot.slane %v917, %v930
    %v932 = vcombine.high %v924, %v924
    %v933 = vcombine.high %v931, %v931
    %v934 = vcombine.high %v910, %v910
    %v936 = vunpack.c.l.s4 1983009808
    %v937 = vunpack.c.0.s8 %v936
    %v938 = vlaneseq
    %v939 = vshrl.u32 %v938, 7
    %v940 = vsub.s32 %v937, %v939
    %v941 = vrot.slane %v910, %v940
    %v943 = vunpack.c.l.s4 1983009808
    %v944 = vunpack.c.0.s8 %v943
    %v945 = vlaneseq
    %v946 = vshrl.u32 %v945, 7
    %v947 = vsub.s32 %v944, %v946
    %v948 = vrot.slane %v934, %v947
    %v949 = vcombine.high %v941, %v941
    %v950 = vcombine.high %v948, %v948
    %v951 = vcombine.high %v911, %v911
    %v953 = vunpack.c.l.s4 1983009808
    %v954 = vunpack.c.0.s8 %v953
    %v955 = vlaneseq
    %v956 = vshrl.u32 %v955, 7
    %v957 = vsub.s32 %v954, %v956
    %v958 = vrot.slane %v911, %v957
    %v960 = vunpack.c.l.s4 1983009808
    %v961 = vunpack.c.0.s8 %v960
    %v962 = vlaneseq
    %v963 = vshrl.u32 %v962, 7
    %v964 = vsub.s32 %v961, %v963
    %v965 = vrot.slane %v951, %v964
    %v966 = vcombine.high %v958, %v958
    %v967 = vcombine.high %v965, %v965
    %v968 = vcombine.high %v912, %v912
    %v970 = vunpack.c.l.s4 1983009808
    %v971 = vunpack.c.0.s8 %v970
    %v972 = vlaneseq
    %v973 = vshrl.u32 %v972, 7
    %v974 = vsub.s32 %v971, %v973
    %v975 = vrot.slane %v912, %v974
    %v977 = vunpack.c.l.s4 1983009808
    %v978 = vunpack.c.0.s8 %v977
    %v979 = vlaneseq
    %v980 = vshrl.u32 %v979, 7
    %v981 = vsub.s32 %v978, %v980
    %v982 = vrot.slane %v968, %v981
    %v983 = vcombine.high %v975, %v975
    %v984 = vcombine.high %v982, %v982
    %vm1001 = vcmask 254976
    %v1002 = vsel %vm1001, %v924, -inf
    %v1003 = vrot.slane %v1002, 4
    %v1004 = vmax.f32 %v1002, %v1003
    %v1005 = vrot.slane %v1004, 2
    %v1006 = vmax.f32 %v1004, %v1005
    %v1007 = vrot.slane %v1006, 1
    %v1008 = vmax.f32 %v1006, %v1007
    %v1009 = vsel %vm1001, %v932, -inf
    %v1010 = vrot.slane %v1009, 4
    %v1011 = vmax.f32 %v1009, %v1010
    %v1012 = vrot.slane %v1011, 2
    %v1013 = vmax.f32 %v1011, %v1012
    %v1014 = vrot.slane %v1013, 1
    %v1015 = vmax.f32 %v1013, %v1014
    %v1016 = vsel %vm1001, %v931, -inf
    %v1017 = vrot.slane %v1016, 4
    %v1018 = vmax.f32 %v1016, %v1017
    %v1019 = vrot.slane %v1018, 2
    %v1020 = vmax.f32 %v1018, %v1019
    %v1021 = vrot.slane %v1020, 1
    %v1022 = vmax.f32 %v1020, %v1021
    %v1023 = vsel %vm1001, %v933, -inf
    %v1024 = vrot.slane %v1023, 4
    %v1025 = vmax.f32 %v1023, %v1024
    %v1026 = vrot.slane %v1025, 2
    %v1027 = vmax.f32 %v1025, %v1026
    %v1028 = vrot.slane %v1027, 1
    %v1029 = vmax.f32 %v1027, %v1028
    %v1030 = vsel %vm1001, %v941, -inf
    %v1031 = vrot.slane %v1030, 4
    %v1032 = vmax.f32 %v1030, %v1031
    %v1033 = vrot.slane %v1032, 2
    %v1034 = vmax.f32 %v1032, %v1033
    %v1035 = vrot.slane %v1034, 1
    %v1036 = vmax.f32 %v1034, %v1035
    %v1037 = vsel %vm1001, %v949, -inf
    %v1038 = vrot.slane %v1037, 4
    %v1039 = vmax.f32 %v1037, %v1038
    %v1040 = vrot.slane %v1039, 2
    %v1041 = vmax.f32 %v1039, %v1040
    %v1042 = vrot.slane %v1041, 1
    %v1043 = vmax.f32 %v1041, %v1042
    %v1044 = vsel %vm1001, %v948, -inf
    %v1045 = vrot.slane %v1044, 4
    %v1046 = vmax.f32 %v1044, %v1045
    %v1047 = vrot.slane %v1046, 2
    %v1048 = vmax.f32 %v1046, %v1047
    %v1049 = vrot.slane %v1048, 1
    %v1050 = vmax.f32 %v1048, %v1049
    %v1051 = vsel %vm1001, %v950, -inf
    %v1052 = vrot.slane %v1051, 4
    %v1053 = vmax.f32 %v1051, %v1052
    %v1054 = vrot.slane %v1053, 2
    %v1055 = vmax.f32 %v1053, %v1054
    %v1056 = vrot.slane %v1055, 1
    %v1057 = vmax.f32 %v1055, %v1056
    %v1058 = vsel %vm1001, %v958, -inf
    %v1059 = vrot.slane %v1058, 4
    %v1060 = vmax.f32 %v1058, %v1059
    %v1061 = vrot.slane %v1060, 2
    %v1062 = vmax.f32 %v1060, %v1061
    %v1063 = vrot.slane %v1062, 1
    %v1064 = vmax.f32 %v1062, %v1063
    %v1065 = vsel %vm1001, %v966, -inf
    %v1066 = vrot.slane %v1065, 4
    %v1067 = vmax.f32 %v1065, %v1066
    %v1068 = vrot.slane %v1067, 2
    %v1069 = vmax.f32 %v1067, %v1068
    %v1070 = vrot.slane %v1069, 1
    %v1071 = vmax.f32 %v1069, %v1070
    %v1072 = vsel %vm1001, %v965, -inf
    %v1073 = vrot.slane %v1072, 4
    %v1074 = vmax.f32 %v1072, %v1073
    %v1075 = vrot.slane %v1074, 2
    %v1076 = vmax.f32 %v1074, %v1075
    %v1077 = vrot.slane %v1076, 1
    %v1078 = vmax.f32 %v1076, %v1077
    %v1079 = vsel %vm1001, %v967, -inf
    %v1080 = vrot.slane %v1079, 4
    %v1081 = vmax.f32 %v1079, %v1080
    %v1082 = vrot.slane %v1081, 2
    %v1083 = vmax.f32 %v1081, %v1082
    %v1084 = vrot.slane %v1083, 1
    %v1085 = vmax.f32 %v1083, %v1084
    %v1086 = vsel %vm1001, %v975, -inf
    %v1087 = vrot.slane %v1086, 4
    %v1088 = vmax.f32 %v1086, %v1087
    %v1089 = vrot.slane %v1088, 2
    %v1090 = vmax.f32 %v1088, %v1089
    %v1091 = vrot.slane %v1090, 1
    %v1092 = vmax.f32 %v1090, %v1091
    %v1093 = vsel %vm1001, %v983, -inf
    %v1094 = vrot.slane %v1093, 4
    %v1095 = vmax.f32 %v1093, %v1094
    %v1096 = vrot.slane %v1095, 2
    %v1097 = vmax.f32 %v1095, %v1096
    %v1098 = vrot.slane %v1097, 1
    %v1099 = vmax.f32 %v1097, %v1098
    %v1100 = vsel %vm1001, %v982, -inf
    %v1101 = vrot.slane %v1100, 4
    %v1102 = vmax.f32 %v1100, %v1101
    %v1103 = vrot.slane %v1102, 2
    %v1104 = vmax.f32 %v1102, %v1103
    %v1105 = vrot.slane %v1104, 1
    %v1106 = vmax.f32 %v1104, %v1105
    %v1107 = vsel %vm1001, %v984, -inf
    %v1108 = vrot.slane %v1107, 4
    %v1109 = vmax.f32 %v1107, %v1108
    %v1110 = vrot.slane %v1109, 2
    %v1111 = vmax.f32 %v1109, %v1110
    %v1112 = vrot.slane %v1111, 1
    %v1113 = vmax.f32 %v1111, %v1112
    %vm1116 = vcmask 1041409
    %v1117 = vsel %vm1116, %v1064, %v1008
    %v1121 = vsel %vm1116, %v1071, %v1015
    %1122 = vrot.lane.b32.xlu0 %v1121, 32
    %v1123 = vpop.permute.xlu0 %1122
    %v1127 = vsel %vm1116, %v1078, %v1022
    %1128 = vrot.lane.b32.xlu0 %v1127, 64
    %v1129 = vpop.permute.xlu0 %1128
    %v1133 = vsel %vm1116, %v1085, %v1029
    %1134 = vrot.lane.b32.xlu0 %v1133, 96
    %v1135 = vpop.permute.xlu0 %1134
    %v1139 = vsel %vm1116, %v1092, %v1036
    %v1143 = vsel %vm1116, %v1099, %v1043
    %1144 = vrot.lane.b32.xlu0 %v1143, 32
    %v1145 = vpop.permute.xlu0 %1144
    %v1149 = vsel %vm1116, %v1106, %v1050
    %1150 = vrot.lane.b32.xlu0 %v1149, 64
    %v1151 = vpop.permute.xlu0 %1150
    %v1155 = vsel %vm1116, %v1113, %v1057
    %1156 = vrot.lane.b32.xlu0 %v1155, 96
    %v1157 = vpop.permute.xlu0 %1156
    %v1159 = vsel %vm334, %v1117, %v1123
    %v1160 = vsel %vm341, %v1159, %v1129
    %v1161 = vsel %vm348, %v1160, %v1135
    %v1162 = vsel %vm334, %v1139, %v1145
    %v1163 = vsel %vm341, %v1162, %v1151
    %v1164 = vsel %vm348, %v1163, %v1157
    %v1167 = vcombine.low %v1161, %v1164
    %v1169 = vunpack.c.l.s4 1983009808
    %v1170 = vunpack.c.0.s8 %v1169
    %v1171 = vlaneseq
    %v1172 = vshrl.u32 %v1171, 7
    %v1173 = vsub.s32 %v1170, %v1172
    %v1174 = vrot.slane %v1167, %v1173
    %1176 = vst [vmem:[#allocation2] sm:$0xf] %v1174
    // Predicated region
    $region26: #{tpu_custom_call.1} parent=1 // pred_check
      _
    $region27: #{tpu_custom_call.1} parent=1 // pred_check_branch
      %1178 = sbr.rel (0) target = $region29
    $region28: #{tpu_custom_call.1} parent=1 // pred_region
      %s1180 = ssub.s32 64, 64
      %1181 = vsyncadd [#allocation3], %s1180
      %s1183 = sshll.u32 [#allocation2], 4
      %s1184 = int_to_ptr.vmem [resolvable:$true] %s1183
      %1186 = dma.vmem_to_hbm [thread:$0]  %s1184, 64, %s6, [#allocation3]
    $region29: #{tpu_custom_call.1} parent=1 // pred_fallthru
      _
    // Predicated region
    $region30: #{tpu_custom_call.1} parent=1 // pred_check
      _
    $region31: #{tpu_custom_call.1} parent=1 // pred_check_branch
      %1188 = sbr.rel (0) target = $region33
    $region32: #{tpu_custom_call.1} parent=1 // pred_region
      %1189 = dma.done [#allocation3], 64
    $region33: #{tpu_custom_call.1} parent=1 // pred_fallthru
      _
    %1190 = vsyncpa [#allocation3], 1

</llo_original>
